<compile_context>
chip_gen: v5e
topology: v5e:2x2
jax: 0.10.0
libtpu: 0.0.40
codegen_flags: <defaults>
</compile_context>

<pallas_src>
import functools

import jax
import jax.numpy as jnp
import numpy as np
from jax.experimental import pallas as pl
from jax.experimental.pallas import tpu as pltpu

_LANE = 128
_SUBLANE = 8
_MAX_TILE_B = 2048      # safe on all generations with the 48 MiB VMEM limit below
_MIN_SPLIT_ROWS = 256   # split into >=2 tiles only if each tile gets >= this many rows


def _round_up(x, m):
    return ((x + m - 1) // m) * m


def _cdiv(a, b):
    return (a + b - 1) // b


def _choose_tile_b(B):
    num_tiles = _cdiv(B, _MAX_TILE_B)
    if num_tiles == 1 and B >= 2 * _MIN_SPLIT_ROWS:
        num_tiles = 2                      # let "parallel" shard across v7x's 2 TCs
    tile_b = _round_up(_cdiv(B, num_tiles), _SUBLANE)
    return min(tile_b, _round_up(B, _SUBLANE))


def actor_kernel(x_ref, w1_ref, b1_ref, w2_ref, b2_ref, w3_ref, b3_ref, o_ref):
    """fc1+ReLU -> fc2+ReLU -> fc3+tanh on one (tile_b, state_dim) batch tile."""
    x = x_ref[...].astype(jnp.bfloat16)
    h1 = jnp.dot(x, w1_ref[...], preferred_element_type=jnp.float32)
    h1 = jnp.maximum(h1 + b1_ref[...], 0.0)
    h2 = jnp.dot(h1.astype(jnp.bfloat16), w2_ref[...],
                 preferred_element_type=jnp.float32)
    h2 = jnp.maximum(h2 + b2_ref[...], 0.0)
    h3 = jnp.dot(h2.astype(jnp.bfloat16), w3_ref[...],
                 preferred_element_type=jnp.float32)
    o_ref[...] = jnp.tanh(h3 + b3_ref[...]).astype(o_ref.dtype)


def _pad2d(a, rows, cols, dtype):
    r, c = a.shape
    return jnp.pad(a.astype(dtype), ((0, rows - r), (0, cols - c)))


def prepare_actor_params(params):
    """One-time pad (output dims -> multiples of 128) + bf16 cast of the weights.

    All padding is with zeros, so padded hidden columns stay exactly 0 through
    relu (0 weight col + 0 bias -> relu(0)=0) and contribute nothing downstream;
    the wrapper slices the real action_dim columns back out.
    """
    w1, b1, w2, b2, w3, b3 = (params[k] for k in ("w1", "b1", "w2", "b2", "w3", "b3"))
    state_dim, hidden1 = w1.shape
    hidden2 = w2.shape[1]
    action_dim = w3.shape[1]
    H1 = _round_up(hidden1, _LANE)
    H2 = _round_up(hidden2, _LANE)
    A = _round_up(action_dim, _LANE)
    return {
        "w1": _pad2d(w1, state_dim, H1, jnp.bfloat16),
        "b1": _pad2d(b1, 1, H1, jnp.float32),
        "w2": _pad2d(w2, H1, H2, jnp.bfloat16),
        "b2": _pad2d(b2, 1, H2, jnp.float32),
        "w3": _pad2d(w3, H2, A, jnp.bfloat16),
        "b3": _pad2d(b3, 1, A, jnp.float32),
    }


@functools.partial(jax.jit, static_argnames=("action_dim",))
def actor_forward(state, prep, *, action_dim):
    """state: (B, state_dim) f32; prep: pre-padded bf16 weights / f32 biases."""
    w1, b1, w2, b2, w3, b3 = (prep[k] for k in ("w1", "b1", "w2", "b2", "w3", "b3"))
    B, state_dim = state.shape
    H1 = w1.shape[1]
    H2 = w2.shape[1]
    A = w3.shape[1]

    tile_b = _choose_tile_b(B)
    grid = (_cdiv(B, tile_b),)

    vmem = pltpu.MemorySpace.VMEM
    resident = lambda a: pl.BlockSpec(a.shape, lambda i: (0, 0), memory_space=vmem)

    flops = 2 * B * (state_dim * H1 + H1 * H2 + H2 * A)
    bytes_accessed = (
        B * state_dim * 4                              # state in (f32, unpadded)
        + (state_dim * H1 + H1 * H2 + H2 * A) * 2      # bf16 weights (resident)
        + (H1 + H2 + A) * 4                            # biases
        + B * A * 2                                    # bf16 output
    )

    out = pl.pallas_call(
        actor_kernel,
        out_shape=jax.ShapeDtypeStruct((B, A), jnp.bfloat16),
        grid=grid,
        in_specs=[
            # Full-array last dim (state_dim) => exempt from the 128-lane rule;
            # ragged last batch tile rows are dropped on writeback.
            pl.BlockSpec((tile_b, state_dim), lambda i: (i, 0), memory_space=vmem),
            resident(w1), resident(b1),
            resident(w2), resident(b2),
            resident(w3), resident(b3),
        ],
        out_specs=pl.BlockSpec((tile_b, A), lambda i: (i, 0), memory_space=vmem),
        compiler_params=pltpu.CompilerParams(
            dimension_semantics=("parallel",),
            vmem_limit_bytes=48 * 1024 * 1024),
        cost_estimate=pl.CostEstimate(
            flops=flops,
            transcendentals=B * A,
            bytes_accessed=bytes_accessed),
    )(state, w1, b1, w2, b2, w3, b3)

    # Slice the real action columns and restore f32 (fuses with the slice).
    return out[:, :action_dim].astype(jnp.float32)


def init_actor_params(key, state_dim, hidden1, hidden2, action_dim, init_w=0.003):
    """Mirrors Actor.__init__/init_weights.

    PyTorch stores Linear weights as (out, in); init_fanin uses size[0] (=out)
    as fanin.  We replicate the bounds but store weights transposed as (in, out)
    for the kernel's x @ W layout.  Biases keep the PyTorch Linear default
    U(-1/sqrt(in_features), +1/sqrt(in_features)) since init_weights does not
    touch them.
    """
    ks = jax.random.split(key, 6)
    v1 = 1.0 / np.sqrt(hidden1)          # fanin = fc1.weight.size(0) = hidden1
    v2 = 1.0 / np.sqrt(hidden2)          # fanin = fc2.weight.size(0) = hidden2
    bb1 = 1.0 / np.sqrt(state_dim)
    bb2 = 1.0 / np.sqrt(hidden1)
    bb3 = 1.0 / np.sqrt(hidden2)
    u = lambda k, shape, b: jax.random.uniform(k, shape, jnp.float32, -b, b)
    return {
        "w1": u(ks[0], (state_dim, hidden1), v1),
        "b1": u(ks[1], (1, hidden1), bb1),
        "w2": u(ks[2], (hidden1, hidden2), v2),
        "b2": u(ks[3], (1, hidden2), bb2),
        "w3": u(ks[4], (hidden2, action_dim), init_w),
        "b3": u(ks[5], (1, action_dim), bb3),
    }


def actor_reference_f32(state, p):
    h1 = jnp.maximum(state @ p["w1"] + p["b1"], 0.0)
    h2 = jnp.maximum(h1 @ p["w2"] + p["b2"], 0.0)
    return jnp.tanh(h2 @ p["w3"] + p["b3"])


def actor_reference_bf16(state, p):
    """Reference with the same bf16-input / f32-accumulate matmuls as the kernel."""
    dot = lambda a, b: jnp.dot(a.astype(jnp.bfloat16), b.astype(jnp.bfloat16),
                               preferred_element_type=jnp.float32)
    h1 = jnp.maximum(dot(state, p["w1"]) + p["b1"], 0.0)
    h2 = jnp.maximum(dot(h1, p["w2"]) + p["b2"], 0.0)
    return jnp.tanh(dot(h2, p["w3"]) + p["b3"])


if __name__ == "__main__":
    # Small shapes consistent with the module (state_dim -> hidden1 -> hidden2 -> action_dim)
    B, state_dim, hidden1, hidden2, action_dim = 8, 16, 64, 32, 4

    key = jax.random.PRNGKey(0)
    k_state, k_params, k_big = jax.random.split(key, 3)
    state = jax.random.normal(k_state, (B, state_dim), dtype=jnp.float32)
    params = init_actor_params(k_params, state_dim, hidden1, hidden2, action_dim)
    prep = jax.tree_util.tree_map(jax.block_until_ready, prepare_actor_params(params))

    out = jax.block_until_ready(actor_forward(state, prep, action_dim=action_dim))
    assert out.shape == (B, action_dim)

    # Kernel output passes through a bf16 store -> compare with tolerances that
    # cover bf16 quantization of tanh outputs in [-1, 1].
    ref_matched = actor_reference_bf16(state, params)
    np.testing.assert_allclose(np.asarray(out), np.asarray(ref_matched),
                               rtol=1e-2, atol=1e-2)
    ref_f32 = actor_reference_f32(state, params)
    np.testing.assert_allclose(np.asarray(out), np.asarray(ref_f32),
                               rtol=3e-2, atol=3e-2)

    # Larger, non-multiple batch: exercises the >=2-tile grid (megacore split)
    # and the ragged last batch tile (no batch padding in HBM).
    B2 = 1000
    state2 = jax.random.normal(k_big, (B2, state_dim), dtype=jnp.float32)
    out2 = jax.block_until_ready(actor_forward(state2, prep, action_dim=action_dim))
    assert out2.shape == (B2, action_dim)
    np.testing.assert_allclose(np.asarray(out2),
                               np.asarray(actor_reference_bf16(state2, params)),
                               rtol=1e-2, atol=1e-2)

    print("KERNEL_OK")
</pallas_src>

<mosaic_0001>
module attributes {stable_mosaic.version = 11 : i64} {
  func.func @actor_kernel(%arg0: i32, %arg1: memref<8x16xf32, #tpu.memory_space<vmem>>, %arg2: memref<16x128xbf16, #tpu.memory_space<vmem>>, %arg3: memref<1x128xf32, #tpu.memory_space<vmem>>, %arg4: memref<128x128xbf16, #tpu.memory_space<vmem>>, %arg5: memref<1x128xf32, #tpu.memory_space<vmem>>, %arg6: memref<128x128xbf16, #tpu.memory_space<vmem>>, %arg7: memref<1x128xf32, #tpu.memory_space<vmem>>, %arg8: memref<8x128xbf16, #tpu.memory_space<vmem>>) attributes {dimension_semantics = [#tpu.dimension_semantics<parallel>], iteration_bounds = array<i64: 1>, scalar_prefetch = 0 : i64, scratch_operands = 0 : i64, tpu.core_type = #tpu.core_type<tc>, window_params = [{transform_indices = @transform_0, window_bounds = array<i64: 8, 16>}, {pipeline_mode = #tpu.pipeline_mode<synchronous>, transform_indices = @transform_1, window_bounds = array<i64: 16, 128>}, {pipeline_mode = #tpu.pipeline_mode<synchronous>, transform_indices = @transform_2, window_bounds = array<i64: 1, 128>}, {pipeline_mode = #tpu.pipeline_mode<synchronous>, transform_indices = @transform_3, window_bounds = array<i64: 128, 128>}, {pipeline_mode = #tpu.pipeline_mode<synchronous>, transform_indices = @transform_4, window_bounds = array<i64: 1, 128>}, {pipeline_mode = #tpu.pipeline_mode<synchronous>, transform_indices = @transform_5, window_bounds = array<i64: 128, 128>}, {pipeline_mode = #tpu.pipeline_mode<synchronous>, transform_indices = @transform_6, window_bounds = array<i64: 1, 128>}, {transform_indices = @transform_7, window_bounds = array<i64: 8, 128>}]} {
    %c0 = arith.constant 0 : index
    %c0_0 = arith.constant 0 : index
    %0 = vector.load %arg1[%c0, %c0_0] : memref<8x16xf32, #tpu.memory_space<vmem>>, vector<8x16xf32>
    %1 = arith.truncf %0 : vector<8x16xf32> to vector<8x16xbf16>
    %c0_1 = arith.constant 0 : index
    %c0_2 = arith.constant 0 : index
    %2 = vector.load %arg2[%c0_1, %c0_2] : memref<16x128xbf16, #tpu.memory_space<vmem>>, vector<16x128xbf16>
    %cst = arith.constant dense<0.000000e+00> : vector<8x128xf32>
    %3 = tpu.matmul %1, %2, %cst {dimension_numbers = #tpu.dot_dimension_numbers<[1], [0], [0], [1], [0, 0, 1, 1], [], []>} : vector<8x16xbf16>, vector<16x128xbf16>, vector<8x128xf32> -> vector<8x128xf32>
    %c0_3 = arith.constant 0 : index
    %c0_4 = arith.constant 0 : index
    %4 = vector.load %arg3[%c0_3, %c0_4] : memref<1x128xf32, #tpu.memory_space<vmem>>, vector<1x128xf32>
    %5 = vector.broadcast %4 : vector<1x128xf32> to vector<8x128xf32>
    %6 = arith.addf %3, %5 : vector<8x128xf32>
    %cst_5 = arith.constant 0.000000e+00 : f32
    %7 = vector.broadcast %cst_5 : f32 to vector<8x128xf32>
    %8 = arith.maximumf %6, %7 : vector<8x128xf32>
    %9 = arith.truncf %8 : vector<8x128xf32> to vector<8x128xbf16>
    %c0_6 = arith.constant 0 : index
    %c0_7 = arith.constant 0 : index
    %10 = vector.load %arg4[%c0_6, %c0_7] : memref<128x128xbf16, #tpu.memory_space<vmem>>, vector<128x128xbf16>
    %cst_8 = arith.constant dense<0.000000e+00> : vector<8x128xf32>
    %11 = tpu.matmul %9, %10, %cst_8 {dimension_numbers = #tpu.dot_dimension_numbers<[1], [0], [0], [1], [0, 0, 1, 1], [], []>} : vector<8x128xbf16>, vector<128x128xbf16>, vector<8x128xf32> -> vector<8x128xf32>
    %c0_9 = arith.constant 0 : index
    %c0_10 = arith.constant 0 : index
    %12 = vector.load %arg5[%c0_9, %c0_10] : memref<1x128xf32, #tpu.memory_space<vmem>>, vector<1x128xf32>
    %13 = vector.broadcast %12 : vector<1x128xf32> to vector<8x128xf32>
    %14 = arith.addf %11, %13 : vector<8x128xf32>
    %cst_11 = arith.constant 0.000000e+00 : f32
    %15 = vector.broadcast %cst_11 : f32 to vector<8x128xf32>
    %16 = arith.maximumf %14, %15 : vector<8x128xf32>
    %17 = arith.truncf %16 : vector<8x128xf32> to vector<8x128xbf16>
    %c0_12 = arith.constant 0 : index
    %c0_13 = arith.constant 0 : index
    %18 = vector.load %arg6[%c0_12, %c0_13] : memref<128x128xbf16, #tpu.memory_space<vmem>>, vector<128x128xbf16>
    %cst_14 = arith.constant dense<0.000000e+00> : vector<8x128xf32>
    %19 = tpu.matmul %17, %18, %cst_14 {dimension_numbers = #tpu.dot_dimension_numbers<[1], [0], [0], [1], [0, 0, 1, 1], [], []>} : vector<8x128xbf16>, vector<128x128xbf16>, vector<8x128xf32> -> vector<8x128xf32>
    %c0_15 = arith.constant 0 : index
    %c0_16 = arith.constant 0 : index
    %20 = vector.load %arg7[%c0_15, %c0_16] : memref<1x128xf32, #tpu.memory_space<vmem>>, vector<1x128xf32>
    %21 = vector.broadcast %20 : vector<1x128xf32> to vector<8x128xf32>
    %22 = arith.addf %19, %21 : vector<8x128xf32>
    %23 = math.tanh %22 : vector<8x128xf32>
    %24 = arith.truncf %23 : vector<8x128xf32> to vector<8x128xbf16>
    %c0_17 = arith.constant 0 : index
    %c0_18 = arith.constant 0 : index
    %25 = vector.load %arg8[%c0_17, %c0_18] : memref<8x128xbf16, #tpu.memory_space<vmem>>, vector<8x128xbf16>
    tpu.vector_store %arg8[%c0_17, %c0_18], %24 {strides = array<i32>} : memref<8x128xbf16, #tpu.memory_space<vmem>>, vector<8x128xbf16>,
    return
  }
  func.func @transform_0(%arg0: i32) -> (i32, i32) {
    %c0_i32 = arith.constant 0 : i32
    %c0_i32_0 = arith.constant 0 : i32
    return %arg0, %c0_i32 : i32, i32
  }
  func.func @transform_1(%arg0: i32) -> (i32, i32) {
    %c0_i32 = arith.constant 0 : i32
    %c0_i32_0 = arith.constant 0 : i32
    %c0_i32_1 = arith.constant 0 : i32
    return %c0_i32, %c0_i32_0 : i32, i32
  }
  func.func @transform_2(%arg0: i32) -> (i32, i32) {
    %c0_i32 = arith.constant 0 : i32
    %c0_i32_0 = arith.constant 0 : i32
    %c0_i32_1 = arith.constant 0 : i32
    return %c0_i32, %c0_i32_0 : i32, i32
  }
  func.func @transform_3(%arg0: i32) -> (i32, i32) {
    %c0_i32 = arith.constant 0 : i32
    %c0_i32_0 = arith.constant 0 : i32
    %c0_i32_1 = arith.constant 0 : i32
    return %c0_i32, %c0_i32_0 : i32, i32
  }
  func.func @transform_4(%arg0: i32) -> (i32, i32) {
    %c0_i32 = arith.constant 0 : i32
    %c0_i32_0 = arith.constant 0 : i32
    %c0_i32_1 = arith.constant 0 : i32
    return %c0_i32, %c0_i32_0 : i32, i32
  }
  func.func @transform_5(%arg0: i32) -> (i32, i32) {
    %c0_i32 = arith.constant 0 : i32
    %c0_i32_0 = arith.constant 0 : i32
    %c0_i32_1 = arith.constant 0 : i32
    return %c0_i32, %c0_i32_0 : i32, i32
  }
  func.func @transform_6(%arg0: i32) -> (i32, i32) {
    %c0_i32 = arith.constant 0 : i32
    %c0_i32_0 = arith.constant 0 : i32
    %c0_i32_1 = arith.constant 0 : i32
    return %c0_i32, %c0_i32_0 : i32, i32
  }
  func.func @transform_7(%arg0: i32) -> (i32, i32) {
    %c0_i32 = arith.constant 0 : i32
    %c0_i32_0 = arith.constant 0 : i32
    return %arg0, %c0_i32 : i32, i32
  }
}

</mosaic_0001>

<llo_original>
// kernel: actor_forward.1
$region0: #{actor_forward.1}
  #allocation0 [shape = 'u32[]', space=smem, size = 0x4, offset = 0x4, fixed_abs, tag = 'smem constant byte address 0x4 - core index']
  #allocation1 [shape = 'u32[72,128]{1,0:T(1,128)}', space=vmem, size = 0x9000, scoped, tag = 'internal scratch']
  %s0 = inlined_call_operand.hbm [shape: f32[8,16], index: 0, kind: input, shape index: {}]
  %s1 = inlined_call_operand.hbm [shape: bf16[16,128], index: 1, kind: input, shape index: {}]
  %s2 = inlined_call_operand.hbm [shape: f32[1,128], index: 2, kind: input, shape index: {}]
  %s3 = inlined_call_operand.hbm [shape: bf16[128,128], index: 3, kind: input, shape index: {}]
  %s4 = inlined_call_operand.vmem [shape: f32[1,128], index: 4, kind: input, shape index: {}]
  %s5 = inlined_call_operand.hbm [shape: bf16[128,128], index: 5, kind: input, shape index: {}]
  %s6 = inlined_call_operand.vmem [shape: f32[1,128], index: 6, kind: input, shape index: {}]
  %s7 = inlined_call_operand.vmem [shape: bf16[8,128], index: 7, kind: output, shape index: {}]
  %s8 = sld [smem:[#allocation0]]
  $region58: #{actor_forward.1} parent=0
    _
  %s10 = ssub.s32 1, %s8
  %s11 = scalar_select 0, %s10, %s8
  $region1: #{actor_forward.1} parent=0
    #allocation2 [shape = 'u8[4096]{0}', space=vmem, size = 0x1000, scoped, tag = 'input window, operand 0, single buffered']
    #allocation3 [shape = 's32[1]{0}', space=sflag, size = 0x4, scoped, tag = 'scoped memory for actor_forward.1']
    #allocation4 [shape = 'u8[4096]{0}', space=vmem, size = 0x1000, scoped, tag = 'input window, operand 1, single buffered']
    #allocation5 [shape = 's32[1]{0}', space=sflag, size = 0x4, scoped, tag = 'scoped memory for actor_forward.1']
    #allocation6 [shape = 'u8[512]{0}', space=vmem, size = 0x400, scoped, tag = 'input window, operand 2, single buffered']
    #allocation7 [shape = 'u8[32768]{0}', space=vmem, size = 0x8000, scoped, tag = 'input window, operand 3, single buffered']
    #allocation8 [shape = 's32[1]{0}', space=sflag, size = 0x4, scoped, tag = 'scoped memory for actor_forward.1']
    #allocation9 [shape = 'u8[32768]{0}', space=vmem, size = 0x8000, scoped, tag = 'input window, operand 5, single buffered']
    %12 = vsyncpa [#allocation3], 0
    %13 = vsyncpa [#allocation5], 0
    %14 = vsyncpa [#allocation8], 0
    // Predicated region
    $region2: #{actor_forward.1} parent=1 // pred_check
      _
    $region3: #{actor_forward.1} parent=1 // pred_check_branch
      %16 = sbr.rel (0) target = $region5
    $region4: #{actor_forward.1} parent=1 // pred_region
      %18 = vsyncadd [#allocation3], 0
      %s20 = sshll.u32 %s0, 4
      %s21 = int_to_ptr.hbm [resolvable:$true] %s20
      %s22 = sshll.u32 [#allocation2], 4
      %s23 = int_to_ptr.vmem [resolvable:$true] %s22
      %25 = dma.hbm_to_vmem [thread:$0]  %s21, 128, %s23, [#allocation3]
    $region5: #{actor_forward.1} parent=1 // pred_fallthru
      _
    // Predicated region
    $region6: #{actor_forward.1} parent=1 // pred_check
      _
    $region7: #{actor_forward.1} parent=1 // pred_check_branch
      %27 = sbr.rel (0) target = $region9
    $region8: #{actor_forward.1} parent=1 // pred_region
      %29 = vsyncadd [#allocation5], 0
      %s30 = sshll.u32 %s1, 4
      %s31 = int_to_ptr.hbm [resolvable:$true] %s30
      %s32 = sshll.u32 [#allocation4], 4
      %s33 = int_to_ptr.vmem [resolvable:$true] %s32
      %38 = dma.hbm_to_vmem [thread:$0]  %s31, 128, %s33, [#allocation5], 64, 64, 4
    $region9: #{actor_forward.1} parent=1 // pred_fallthru
      _
    // Predicated region
    $region10: #{actor_forward.1} parent=1 // pred_check
      _
    $region11: #{actor_forward.1} parent=1 // pred_check_branch
      %40 = sbr.rel (0) target = $region13
    $region12: #{actor_forward.1} parent=1 // pred_region
      %42 = vsyncadd [#allocation5], 0
      %s44 = sshll.u32 %s2, 4
      %s45 = int_to_ptr.hbm [resolvable:$true] %s44
      %s46 = sshll.u32 [#allocation6], 4
      %s47 = int_to_ptr.vmem [resolvable:$true] %s46
      %49 = dma.hbm_to_vmem [thread:$0]  %s45, 16, %s47, [#allocation5]
    $region13: #{actor_forward.1} parent=1 // pred_fallthru
      _
    // Predicated region
    $region14: #{actor_forward.1} parent=1 // pred_check
      _
    $region15: #{actor_forward.1} parent=1 // pred_check_branch
      %51 = sbr.rel (0) target = $region17
    $region16: #{actor_forward.1} parent=1 // pred_region
      %53 = vsyncadd [#allocation8], 0
      %s54 = sshll.u32 %s3, 4
      %s55 = int_to_ptr.hbm [resolvable:$true] %s54
      %s56 = sshll.u32 [#allocation7], 4
      %s57 = int_to_ptr.vmem [resolvable:$true] %s56
      %62 = dma.hbm_to_vmem [thread:$0]  %s55, 1024, %s57, [#allocation8], 64, 64, 4
    $region17: #{actor_forward.1} parent=1 // pred_fallthru
      _
    // Predicated region
    $region18: #{actor_forward.1} parent=1 // pred_check
      _
    $region19: #{actor_forward.1} parent=1 // pred_check_branch
      %64 = sbr.rel (0) target = $region21
    $region20: #{actor_forward.1} parent=1 // pred_region
      _
    $region21: #{actor_forward.1} parent=1 // pred_fallthru
      _
    // Predicated region
    $region22: #{actor_forward.1} parent=1 // pred_check
      _
    $region23: #{actor_forward.1} parent=1 // pred_check_branch
      %66 = sbr.rel (0) target = $region25
    $region24: #{actor_forward.1} parent=1 // pred_region
      %68 = vsyncadd [#allocation8], 0
      %s69 = sshll.u32 %s5, 4
      %s70 = int_to_ptr.hbm [resolvable:$true] %s69
      %s71 = sshll.u32 [#allocation9], 4
      %s72 = int_to_ptr.vmem [resolvable:$true] %s71
      %77 = dma.hbm_to_vmem [thread:$0]  %s70, 1024, %s72, [#allocation8], 64, 64, 4
    $region25: #{actor_forward.1} parent=1 // pred_fallthru
      _
    // Predicated region
    $region26: #{actor_forward.1} parent=1 // pred_check
      _
    $region27: #{actor_forward.1} parent=1 // pred_check_branch
      %79 = sbr.rel (0) target = $region29
    $region28: #{actor_forward.1} parent=1 // pred_region
      _
    $region29: #{actor_forward.1} parent=1 // pred_fallthru
      _
    // Predicated region
    $region30: #{actor_forward.1} parent=1 // pred_check
      _
    $region31: #{actor_forward.1} parent=1 // pred_check_branch
      %81 = sbr.rel (0) target = $region33
    $region32: #{actor_forward.1} parent=1 // pred_region
      %83 = dma.done [#allocation3], 128
    $region33: #{actor_forward.1} parent=1 // pred_fallthru
      _
    // Predicated region
    $region34: #{actor_forward.1} parent=1 // pred_check
      _
    $region35: #{actor_forward.1} parent=1 // pred_check_branch
      %85 = sbr.rel (0) target = $region37
    $region36: #{actor_forward.1} parent=1 // pred_region
      %87 = dma.done [#allocation5], 128
    $region37: #{actor_forward.1} parent=1 // pred_fallthru
      _
    // Predicated region
    $region38: #{actor_forward.1} parent=1 // pred_check
      _
    $region39: #{actor_forward.1} parent=1 // pred_check_branch
      %89 = sbr.rel (0) target = $region41
    $region40: #{actor_forward.1} parent=1 // pred_region
      %91 = dma.done [#allocation5], 16
    $region41: #{actor_forward.1} parent=1 // pred_fallthru
      _
    // Predicated region
    $region42: #{actor_forward.1} parent=1 // pred_check
      _
    $region43: #{actor_forward.1} parent=1 // pred_check_branch
      %93 = sbr.rel (0) target = $region45
    $region44: #{actor_forward.1} parent=1 // pred_region
      %95 = dma.done [#allocation8], 1024
    $region45: #{actor_forward.1} parent=1 // pred_fallthru
      _
    // Predicated region
    $region46: #{actor_forward.1} parent=1 // pred_check
      _
    $region47: #{actor_forward.1} parent=1 // pred_check_branch
      %97 = sbr.rel (0) target = $region49
    $region48: #{actor_forward.1} parent=1 // pred_region
      %99 = dma.done [#allocation8], 1024
    $region49: #{actor_forward.1} parent=1 // pred_fallthru
      _
    %v101 = vld [vmem:[#allocation2] sm:$0xff]
    %v102 = vpack.c.bf16 %v101, %v101
    %v103 = vld [vmem:[#allocation4] sm:$0xf]
    %v104 = vld [vmem:[#allocation4 + $0x4] sm:$0xf]
    %v105 = vld [vmem:[#allocation6] sm:$0x1]
    %v107 = vperm.slane %v105, 0
    %v111 = vunpack.c.l.b16 %v103
    %v112 = vunpack.c.l.b16 %v104
    %v113 = vpack.c.b16 %v112, %v111
    %vm115 = vcmask 130048
    %v117 = vsel %vm115, %v102, 0
    %119 = vmatpush.bf16.msra.mxu0 0
    %120 = vmatpush.bf16.msra.mxu0 0
    %121 = vmatpush.bf16.msra.mxu0 0
    %122 = vmatpush.bf16.msra.mxu0 0
    %123 = vmatpush.bf16.msra.mxu0 0
    %124 = vmatpush.bf16.msra.mxu0 0
    %125 = vmatpush.bf16.msra.mxu0 0
    %126 = vmatpush.bf16.msra.mxu0 %v113
    %127 = vmatmul.bf16.gmra.mxu0 %v117
    %v128 = vpop.f32.mrf.mxu0
    %v129 = vadd.f32 %v107, %v128
    %v130 = vpop.f32.mrf.mxu0
    %131 = vdwg.mxu0
    %v132 = vmax.f32 %v129, 0.0
    %v133 = vpack.c.bf16 %v132, %v132
    %v134 = vld [vmem:[#allocation7] sm:$0xf]
    %v135 = vld [vmem:[#allocation7 + $0x4] sm:$0xf]
    %v136 = vld [vmem:[#allocation7 + $0x8] sm:$0xf]
    %v137 = vld [vmem:[#allocation7 + $0xc] sm:$0xf]
    %v138 = vld [vmem:[#allocation7 + $0x10] sm:$0xf]
    %v139 = vld [vmem:[#allocation7 + $0x14] sm:$0xf]
    %v140 = vld [vmem:[#allocation7 + $0x18] sm:$0xf]
    %v141 = vld [vmem:[#allocation7 + $0x1c] sm:$0xf]
    %v142 = vld [vmem:[#allocation7 + $0x20] sm:$0xf]
    %v143 = vld [vmem:[#allocation7 + $0x24] sm:$0xf]
    %v144 = vld [vmem:[#allocation7 + $0x28] sm:$0xf]
    %v145 = vld [vmem:[#allocation7 + $0x2c] sm:$0xf]
    %v146 = vld [vmem:[#allocation7 + $0x30] sm:$0xf]
    %v147 = vld [vmem:[#allocation7 + $0x34] sm:$0xf]
    %v148 = vld [vmem:[#allocation7 + $0x38] sm:$0xf]
    %v149 = vld [vmem:[#allocation7 + $0x3c] sm:$0xf]
    %v150 = vld [vmem:[%s4] sm:$0x1]
    %v152 = vperm.slane %v150, 0
    %v170 = vunpack.c.l.b16 %v134
    %v171 = vunpack.c.l.b16 %v135
    %v172 = vunpack.c.l.b16 %v136
    %v173 = vunpack.c.l.b16 %v137
    %v174 = vunpack.c.l.b16 %v138
    %v175 = vunpack.c.l.b16 %v139
    %v176 = vunpack.c.l.b16 %v140
    %v177 = vunpack.c.l.b16 %v141
    %v178 = vunpack.c.l.b16 %v142
    %v179 = vunpack.c.l.b16 %v143
    %v180 = vunpack.c.l.b16 %v144
    %v181 = vunpack.c.l.b16 %v145
    %v182 = vunpack.c.l.b16 %v146
    %v183 = vunpack.c.l.b16 %v147
    %v184 = vunpack.c.l.b16 %v148
    %v185 = vunpack.c.l.b16 %v149
    %v186 = vpack.c.b16 %v171, %v170
    %v187 = vpack.c.b16 %v173, %v172
    %v188 = vpack.c.b16 %v175, %v174
    %v189 = vpack.c.b16 %v177, %v176
    %v190 = vpack.c.b16 %v179, %v178
    %v191 = vpack.c.b16 %v181, %v180
    %v192 = vpack.c.b16 %v183, %v182
    %v193 = vpack.c.b16 %v185, %v184
    %202 = vmatpush.bf16.msra.mxu0 %v193
    %203 = vmatpush.bf16.msra.mxu0 %v192
    %204 = vmatpush.bf16.msra.mxu0 %v191
    %205 = vmatpush.bf16.msra.mxu0 %v190
    %206 = vmatpush.bf16.msra.mxu0 %v189
    %207 = vmatpush.bf16.msra.mxu0 %v188
    %208 = vmatpush.bf16.msra.mxu0 %v187
    %209 = vmatpush.bf16.msra.mxu0 %v186
    %210 = vmatmul.bf16.gmra.mxu0 %v133
    %v211 = vpop.f32.mrf.mxu0
    %v212 = vadd.f32 %v152, %v211
    %v213 = vpop.f32.mrf.mxu0
    %214 = vdwg.mxu0
    %v215 = vmax.f32 %v212, 0.0
    %v216 = vpack.c.bf16 %v215, %v215
    %v217 = vld [vmem:[#allocation9] sm:$0xf]
    %v218 = vld [vmem:[#allocation9 + $0x4] sm:$0xf]
    %v219 = vld [vmem:[#allocation9 + $0x8] sm:$0xf]
    %v220 = vld [vmem:[#allocation9 + $0xc] sm:$0xf]
    %v221 = vld [vmem:[#allocation9 + $0x10] sm:$0xf]
    %v222 = vld [vmem:[#allocation9 + $0x14] sm:$0xf]
    %v223 = vld [vmem:[#allocation9 + $0x18] sm:$0xf]
    %v224 = vld [vmem:[#allocation9 + $0x1c] sm:$0xf]
    %v225 = vld [vmem:[#allocation9 + $0x20] sm:$0xf]
    %v226 = vld [vmem:[#allocation9 + $0x24] sm:$0xf]
    %v227 = vld [vmem:[#allocation9 + $0x28] sm:$0xf]
    %v228 = vld [vmem:[#allocation9 + $0x2c] sm:$0xf]
    %v229 = vld [vmem:[#allocation9 + $0x30] sm:$0xf]
    %v230 = vld [vmem:[#allocation9 + $0x34] sm:$0xf]
    %v231 = vld [vmem:[#allocation9 + $0x38] sm:$0xf]
    %v232 = vld [vmem:[#allocation9 + $0x3c] sm:$0xf]
    %v233 = vld [vmem:[%s6] sm:$0x1]
    %v235 = vperm.slane %v233, 0
    %v253 = vunpack.c.l.b16 %v217
    %v254 = vunpack.c.l.b16 %v218
    %v255 = vunpack.c.l.b16 %v219
    %v256 = vunpack.c.l.b16 %v220
    %v257 = vunpack.c.l.b16 %v221
    %v258 = vunpack.c.l.b16 %v222
    %v259 = vunpack.c.l.b16 %v223
    %v260 = vunpack.c.l.b16 %v224
    %v261 = vunpack.c.l.b16 %v225
    %v262 = vunpack.c.l.b16 %v226
    %v263 = vunpack.c.l.b16 %v227
    %v264 = vunpack.c.l.b16 %v228
    %v265 = vunpack.c.l.b16 %v229
    %v266 = vunpack.c.l.b16 %v230
    %v267 = vunpack.c.l.b16 %v231
    %v268 = vunpack.c.l.b16 %v232
    %v269 = vpack.c.b16 %v254, %v253
    %v270 = vpack.c.b16 %v256, %v255
    %v271 = vpack.c.b16 %v258, %v257
    %v272 = vpack.c.b16 %v260, %v259
    %v273 = vpack.c.b16 %v262, %v261
    %v274 = vpack.c.b16 %v264, %v263
    %v275 = vpack.c.b16 %v266, %v265
    %v276 = vpack.c.b16 %v268, %v267
    %285 = vmatpush.bf16.msra.mxu0 %v276
    %286 = vmatpush.bf16.msra.mxu0 %v275
    %287 = vmatpush.bf16.msra.mxu0 %v274
    %288 = vmatpush.bf16.msra.mxu0 %v273
    %289 = vmatpush.bf16.msra.mxu0 %v272
    %290 = vmatpush.bf16.msra.mxu0 %v271
    %291 = vmatpush.bf16.msra.mxu0 %v270
    %292 = vmatpush.bf16.msra.mxu0 %v269
    %293 = vmatmul.bf16.gmra.mxu0 %v216
    %v294 = vpop.f32.mrf.mxu0
    %v295 = vadd.f32 %v235, %v294
    %v296 = vpop.f32.mrf.mxu0
    %297 = vdwg.mxu0
    %v298 = vtanh.pop %v295
    %v299 = vpack.c.bf16 %v298, %v298
    %300 = vst [vmem:[%s7] sm:$0xf] %v299
    // Predicated region
    $region50: #{actor_forward.1} parent=1 // pred_check
      _
    $region51: #{actor_forward.1} parent=1 // pred_check_branch
      %302 = sbr.rel (0) target = $region53
    $region52: #{actor_forward.1} parent=1 // pred_region
      _
    $region53: #{actor_forward.1} parent=1 // pred_fallthru
      _
    // Predicated region
    $region54: #{actor_forward.1} parent=1 // pred_check
      _
    $region55: #{actor_forward.1} parent=1 // pred_check_branch
      %304 = sbr.rel (0) target = $region57
    $region56: #{actor_forward.1} parent=1 // pred_region
      _
    $region57: #{actor_forward.1} parent=1 // pred_fallthru
      _
    %305 = vsyncpa [#allocation3], 1
    %306 = vsyncpa [#allocation5], 1
    %307 = vsyncpa [#allocation8], 1

</llo_original>
